<compile_context>
chip_gen: v6e
topology: v6e:2x2x1
jax: 0.10.0
libtpu: 0.0.40
codegen_flags: <defaults>
</compile_context>

<pallas_src>
import jax
import jax.numpy as jnp
import numpy as np
from jax.experimental import pallas as pl
from jax.experimental.pallas import tpu as pltpu


_LANE = 128
_TARGET_LOGICAL_BLOCK_BYTES = 4 * 1024 * 1024   # ~4 MiB useful bytes per grid step
_MAX_PHYS_BLOCK_BYTES = 6 * 1024 * 1024          # sublane-padded VMEM per block
_VMEM_LIMIT_BYTES = 32 * 1024 * 1024             # explicit scoped-VMEM request


def _round_up(a, m):
    return ((a + m - 1) // m) * m


def _drop_path_kernel(scale_ref, x_ref, o_ref):
    """One grid step: scale a (B, col_tile) slab by the per-sample f32 scale."""
    x = x_ref[...].astype(jnp.float32)            # upcast: exact 1/keep_prob scaling
    o_ref[...] = (x * scale_ref[...]).astype(o_ref.dtype)


def drop_path(x, drop_prob=0.0, training=False, seed=0, key=None,
              _max_block_bytes=None):
    """Pallas DropPath. Matches torch drop_path semantics.

    x: [B, ...]. Returns x unchanged when drop_prob == 0 or not training.
    """
    if drop_prob == 0.0 or not training:
        return x

    keep_prob = 1.0 - float(drop_prob)
    B = x.shape[0]
    N = int(np.prod(x.shape[1:])) if x.ndim > 1 else 1

    # Per-sample Bernoulli(keep_prob): mask = floor(keep_prob + U[0,1)), like torch.
    if key is None:
        key = jax.random.PRNGKey(seed)
    u = jax.random.uniform(key, (B,), dtype=jnp.float32)
    mask = jnp.floor(jnp.float32(keep_prob) + u)
    inv_keep = (1.0 / keep_prob) if keep_prob > 0.0 else 0.0   # guard drop_prob == 1.0
    scale = (mask * jnp.float32(inv_keep)).reshape(B, 1)       # (B, 1) f32 -> VMEM

    # Flat per-sample view: a metadata-only reshape, no HBM pass, no padding.
    x2d = x.reshape(B, N)

    # --- column tile sizing ------------------------------------------------
    itemsize = x.dtype.itemsize
    rows_per_native_tile = max(8, 32 // itemsize)      # 8 f32 / 16 bf16 / 32 int8
    b_phys = _round_up(B, rows_per_native_tile)        # sublane-padded rows in VMEM

    logical_target = (_TARGET_LOGICAL_BLOCK_BYTES if _max_block_bytes is None
                      else _max_block_bytes)
    phys_cap = (_MAX_PHYS_BLOCK_BYTES if _max_block_bytes is None
                else _max_block_bytes)

    col_by_logical = logical_target // max(B * itemsize, 1)
    col_by_phys = phys_cap // max(b_phys * itemsize, 1)
    col_tile = (min(col_by_logical, col_by_phys) // _LANE) * _LANE
    col_tile = max(col_tile, _LANE)                    # lane-dense, unmasked stores
    if col_tile >= N:
        col_tile = N                                   # full-dim block (always legal)
    num_tiles = -(-N // col_tile)                      # ragged edge handled by Pallas

    out2d = pl.pallas_call(
        _drop_path_kernel,
        out_shape=jax.ShapeDtypeStruct((B, N), x.dtype),
        grid=(num_tiles,),
        in_specs=[
            pl.BlockSpec((B, 1), lambda t: (0, 0)),            # per-sample scale
            pl.BlockSpec((B, col_tile), lambda t: (0, t)),     # activation slab
        ],
        out_specs=pl.BlockSpec((B, col_tile), lambda t: (0, t)),
        input_output_aliases={1: 0},                           # reuse x's HBM buffer
        compiler_params=pltpu.CompilerParams(
            dimension_semantics=("parallel",),                 # v7x: shard both TCs
            vmem_limit_bytes=_VMEM_LIMIT_BYTES,                # v5e default is 16 MiB
        ),
    )(scale, x2d)

    return out2d.reshape(x.shape)


class DropPath:
    """Mirror of the PyTorch module (no parameters)."""

    def __init__(self, drop_prob=None):
        self.drop_prob = 0.0 if drop_prob is None else float(drop_prob)
        self.training = True

    def __call__(self, x, seed=0, key=None):
        return drop_path(x, self.drop_prob, self.training, seed=seed, key=key)


if __name__ == "__main__":
    root = jax.random.PRNGKey(0)
    kx, kmask1, kmask2, kmask3 = jax.random.split(root, 4)

    B, L, D = 2, 8, 32
    x = jax.random.normal(kx, (B, L, D), dtype=jnp.float32)
    keep = 0.75

    module = DropPath(drop_prob=0.25)
    module.training = True
    out = jax.block_until_ready(module(x, key=kmask1))
    out_np, x_np = np.asarray(out), np.asarray(x)
    for b in range(B):
        dropped = np.allclose(out_np[b], 0.0)
        kept = np.allclose(out_np[b], x_np[b] / keep, rtol=1e-6, atol=1e-6)
        assert dropped or kept, f"sample {b}: neither dropped nor scaled"

    # eval mode / drop_prob=0 path is identity
    module.training = False
    out_eval = jax.block_until_ready(module(x))
    assert np.allclose(np.asarray(out_eval), x_np)

    # drop_prob == 1.0 yields exact zeros (no NaNs)
    hard = DropPath(drop_prob=1.0)
    hard.training = True
    out_hard = jax.block_until_ready(hard(x, key=kmask2))
    assert np.allclose(np.asarray(out_hard), 0.0)

    # bf16 path: multiply happens in f32, downcast on store
    xb = x.astype(jnp.bfloat16)
    out_b = jax.block_until_ready(drop_path(xb, 0.25, True, key=kmask1))
    out_b32 = np.asarray(out_b.astype(jnp.float32))
    xb32 = np.asarray(xb.astype(jnp.float32))
    for b in range(B):
        dropped = np.allclose(out_b32[b], 0.0)
        kept = np.allclose(out_b32[b], xb32[b] / keep, rtol=1e-2, atol=1e-2)
        assert dropped or kept, f"bf16 sample {b}: neither dropped nor scaled"

    # lane-misaligned feature count (N % 128 != 0): single full-width block, no padding
    xm = jax.random.normal(kx, (3, 5, 7), dtype=jnp.float32)
    out_m = jax.block_until_ready(drop_path(xm, 0.5, True, key=kmask3))
    om, xmn = np.asarray(out_m), np.asarray(xm)
    for b in range(3):
        dropped = np.allclose(om[b], 0.0)
        kept = np.allclose(om[b], xmn[b] / 0.5, rtol=1e-6, atol=1e-6)
        assert dropped or kept, f"misaligned sample {b}: neither dropped nor scaled"

    # ragged multi-tile path (tiny forced block so the last tile is partial)
    xr = jax.random.normal(kx, (2, 40, 50), dtype=jnp.float32)   # N = 2000
    out_r = jax.block_until_ready(
        drop_path(xr, 0.25, True, key=kmask1, _max_block_bytes=4096))
    orr, xrn = np.asarray(out_r), np.asarray(xr)
    for b in range(2):
        dropped = np.allclose(orr[b], 0.0)
        kept = np.allclose(orr[b], xrn[b] / keep, rtol=1e-6, atol=1e-6)
        assert dropped or kept, f"ragged sample {b}: neither dropped nor scaled"

    print("KERNEL_OK")
</pallas_src>

<mosaic_0001>
module attributes {stable_mosaic.version = 11 : i64} {
  func.func @_drop_path_kernel(%arg0: i32, %arg1: memref<2x1xf32, #tpu.memory_space<vmem>>, %arg2: memref<2x256xf32, #tpu.memory_space<vmem>>, %arg3: memref<2x256xf32, #tpu.memory_space<vmem>>) attributes {dimension_semantics = [#tpu.dimension_semantics<parallel>], iteration_bounds = array<i64: 1>, scalar_prefetch = 0 : i64, scratch_operands = 0 : i64, tpu.core_type = #tpu.core_type<tc>, window_params = [{pipeline_mode = #tpu.pipeline_mode<synchronous>, transform_indices = @transform_0, window_bounds = array<i64: 2, 1>}, {transform_indices = @transform_1, window_bounds = array<i64: 2, 256>}, {transform_indices = @transform_2, window_bounds = array<i64: 2, 256>}]} {
    %c0 = arith.constant 0 : index
    %c0_0 = arith.constant 0 : index
    %0 = vector.load %arg2[%c0, %c0_0] : memref<2x256xf32, #tpu.memory_space<vmem>>, vector<2x256xf32>
    %c0_1 = arith.constant 0 : index
    %c0_2 = arith.constant 0 : index
    %1 = vector.load %arg1[%c0_1, %c0_2] : memref<2x1xf32, #tpu.memory_space<vmem>>, vector<2x1xf32>
    %2 = vector.broadcast %1 : vector<2x1xf32> to vector<2x256xf32>
    %3 = arith.mulf %0, %2 : vector<2x256xf32>
    %c0_3 = arith.constant 0 : index
    %c0_4 = arith.constant 0 : index
    %4 = vector.load %arg3[%c0_3, %c0_4] : memref<2x256xf32, #tpu.memory_space<vmem>>, vector<2x256xf32>
    tpu.vector_store %arg3[%c0_3, %c0_4], %3 {strides = array<i32>} : memref<2x256xf32, #tpu.memory_space<vmem>>, vector<2x256xf32>,
    return
  }
  func.func @transform_0(%arg0: i32) -> (i32, i32) {
    %c0_i32 = arith.constant 0 : i32
    %c0_i32_0 = arith.constant 0 : i32
    %c0_i32_1 = arith.constant 0 : i32
    return %c0_i32, %c0_i32_0 : i32, i32
  }
  func.func @transform_1(%arg0: i32) -> (i32, i32) {
    %c0_i32 = arith.constant 0 : i32
    %c0_i32_0 = arith.constant 0 : i32
    return %c0_i32, %arg0 : i32, i32
  }
  func.func @transform_2(%arg0: i32) -> (i32, i32) {
    %c0_i32 = arith.constant 0 : i32
    %c0_i32_0 = arith.constant 0 : i32
    return %c0_i32, %arg0 : i32, i32
  }
}

</mosaic_0001>

<llo_original>
// kernel: tpu_custom_call.1
$region0: #{tpu_custom_call.1}
  #allocation0 [shape = 'u32[]', space=smem, size = 0x4, offset = 0x4, fixed_abs, tag = 'smem constant byte address 0x4 - core index']
  #allocation1 [shape = 'u32[144,128]{1,0:T(1,128)}', space=vmem, size = 0x12000, scoped, tag = 'internal scratch']
  %s0 = inlined_call_operand.vmem [shape: f32[2,1], index: 0, kind: input, shape index: {}]
  %s1 = inlined_call_operand.hbm [shape: f32[2,256], index: 1, kind: input, shape index: {}, may-alias: {1,2}]
  %s2 = inlined_call_operand.hbm [shape: f32[2,256], index: 2, kind: output, shape index: {}, may-alias: {1,2}]
  %s3 = sld [smem:[#allocation0]]
  $region22: #{tpu_custom_call.1} parent=0
    _
  %s5 = ssub.s32 1, %s3
  %s6 = scalar_select 0, %s5, %s3
  $region1: #{tpu_custom_call.1} parent=0
    #allocation2 [shape = 'u8[2048]{0}', space=vmem, size = 0x800, scoped, tag = 'input window, operand 1, single buffered']
    #allocation3 [shape = 's32[1]{0}', space=sflag, size = 0x4, scoped, tag = 'scoped memory for tpu_custom_call.1']
    #allocation4 [shape = 's32[1]{0}', space=sflag, size = 0x4, scoped, tag = 'scoped memory for tpu_custom_call.1']
    #allocation5 [shape = 'u8[2048]{0}', space=vmem, size = 0x800, scoped, tag = 'output window, operand 0, single buffered']
    %7 = vsyncpa [#allocation3], 0
    %8 = vsyncpa [#allocation4], 0
    // Predicated region
    $region2: #{tpu_custom_call.1} parent=1 // pred_check
      _
    $region3: #{tpu_custom_call.1} parent=1 // pred_check_branch
      %10 = sbr.rel (0) target = $region5
    $region4: #{tpu_custom_call.1} parent=1 // pred_region
      _
    $region5: #{tpu_custom_call.1} parent=1 // pred_fallthru
      _
    // Predicated region
    $region6: #{tpu_custom_call.1} parent=1 // pred_check
      _
    $region7: #{tpu_custom_call.1} parent=1 // pred_check_branch
      %12 = sbr.rel (0) target = $region9
    $region8: #{tpu_custom_call.1} parent=1 // pred_region
      %s14 = ssub.s32 64, 64
      %15 = vsyncadd [#allocation3], %s14
      %s17 = sshll.u32 [#allocation2], 4
      %s18 = int_to_ptr.vmem [resolvable:$true] %s17
      %20 = dma.hbm_to_vmem [thread:$0]  %s1, 64, %s18, [#allocation3]
    $region9: #{tpu_custom_call.1} parent=1 // pred_fallthru
      _
    // Predicated region
    $region10: #{tpu_custom_call.1} parent=1 // pred_check
      _
    $region11: #{tpu_custom_call.1} parent=1 // pred_check_branch
      %22 = sbr.rel (0) target = $region13
    $region12: #{tpu_custom_call.1} parent=1 // pred_region
      %23 = dma.done [#allocation3], 64
    $region13: #{tpu_custom_call.1} parent=1 // pred_fallthru
      _
    %v24 = vld [vmem:[#allocation2] sm:$0xf]
    %v25 = vld [vmem:[%s0] sm:$0x3]
    %27 = vset.pattern.permute.xlu0 0
    %28 = vperm.xlu0 %27, %v25
    %v29 = vpop.permute.xlu0 %28
    %v31 = vunpack.c.l.s4 269488144
    %v32 = vunpack.c.0.s8 %v31
    %v33 = vlaneseq
    %v34 = vshrl.u32 %v33, 7
    %v35 = vsub.s32 %v32, %v34
    %v36 = vrot.slane %v29, %v35
    %v38 = vmul.f32 %v24, %v36
    %39 = vst [vmem:[#allocation5] sm:$0xf] %v38
    // Predicated region
    $region14: #{tpu_custom_call.1} parent=1 // pred_check
      _
    $region15: #{tpu_custom_call.1} parent=1 // pred_check_branch
      %41 = sbr.rel (0) target = $region17
    $region16: #{tpu_custom_call.1} parent=1 // pred_region
      %s43 = ssub.s32 64, 64
      %44 = vsyncadd [#allocation4], %s43
      %s46 = sshll.u32 [#allocation5], 4
      %s47 = int_to_ptr.vmem [resolvable:$true] %s46
      %49 = dma.vmem_to_hbm [thread:$0]  %s47, 64, %s2, [#allocation4]
    $region17: #{tpu_custom_call.1} parent=1 // pred_fallthru
      _
    // Predicated region
    $region18: #{tpu_custom_call.1} parent=1 // pred_check
      _
    $region19: #{tpu_custom_call.1} parent=1 // pred_check_branch
      %51 = sbr.rel (0) target = $region21
    $region20: #{tpu_custom_call.1} parent=1 // pred_region
      %52 = dma.done [#allocation4], 64
    $region21: #{tpu_custom_call.1} parent=1 // pred_fallthru
      _
    %53 = vsyncpa [#allocation3], 1
    %54 = vsyncpa [#allocation4], 1

</llo_original>
